<compile_context>
chip_gen: v7x
topology: tpu7x:2x2x1
jax: 0.10.0
libtpu: 0.0.40
codegen_flags: <defaults>
</compile_context>

<pallas_src>
import functools

import jax
import jax.numpy as jnp
from jax.experimental import pallas as pl
from jax.experimental.pallas import tpu as pltpu


def gnn_kernel(x_ref, a_ref, p_ref, w_ref, s_ref, o_ref, *, fin, hidden):
    """Single-block kernel.

    x_ref : [N, Fin]   node features
    a_ref : [N, N]     dense adjacency, A[i, j] = #edges j->i
    p_ref : [G, N]     pooling matrix, P[g, i] = (batch[i] == g)
    w_ref : [2*Fin + 2*H + 3, H] packed params:
              rows [0, 2*Fin)            -> conv1 stacked [W1_root; W1_rel]
              rows [2*Fin, 2*Fin + 2*H)  -> conv2 stacked [W2_root; W2_rel]
              row  2*Fin + 2*H           -> b1
              row  2*Fin + 2*H + 1       -> b2
              row  2*Fin + 2*H + 2       -> lin_out weight row (O == 1)
    s_ref : [3] SMEM scalars: [prelu1_slope, prelu2_slope, lin_out_bias]
    o_ref : [G, 1]
    """
    o_w2 = 2 * fin            # start of conv2 stacked weights
    o_b = o_w2 + 2 * hidden   # start of bias / output rows

    x = x_ref[...]
    adj = a_ref[...]

    # ---- GraphConv 1 (fused root + neighbor branches) ----
    agg1 = jnp.dot(adj, x, preferred_element_type=jnp.float32)          # sum_{j->i} x_j
    h1 = (
        jnp.dot(
            jnp.concatenate([x, agg1], axis=-1),                        # [N, 2*Fin]
            w_ref[0:o_w2, :],                                           # [2*Fin, H]
            preferred_element_type=jnp.float32,
        )
        + w_ref[o_b:o_b + 1, :]                                         # b1
    )
    a1 = s_ref[0]
    h1 = jnp.where(h1 >= 0, h1, a1 * h1)                                # PReLU 1

    # ---- GraphConv 2 (fused) ----
    agg2 = jnp.dot(adj, h1, preferred_element_type=jnp.float32)
    h2 = (
        jnp.dot(
            jnp.concatenate([h1, agg2], axis=-1),                       # [N, 2*H]
            w_ref[o_w2:o_b, :],                                         # [2*H, H]
            preferred_element_type=jnp.float32,
        )
        + w_ref[o_b + 1:o_b + 2, :]                                     # b2
    )
    a2 = s_ref[1]
    h2 = jnp.where(h2 >= 0, h2, a2 * h2)                                # PReLU 2

    # ---- global_add_pool ----
    pooled = jnp.dot(p_ref[...], h2, preferred_element_type=jnp.float32)  # [G, H]

    # ---- lin_out, O == 1: VPU multiply + lane reduction (no lane-width-1 matmul) ----
    wo_row = w_ref[o_b + 2:o_b + 3, :]                                  # [1, H]
    out = jnp.sum(pooled * wo_row, axis=-1, keepdims=True) + s_ref[2]
    o_ref[...] = out.astype(o_ref.dtype)


def gnn_forward(x, edge_index, batch, params, num_graphs):
    """Glue: build dense adjacency + pooling matrices, pack params, call kernel."""
    N, fin = x.shape
    src, dst = edge_index[0], edge_index[1]
    # A[i, j] = number of edges j -> i  (messages flow src -> dst, aggregated at dst)
    adj = jnp.zeros((N, N), jnp.float32).at[dst, src].add(1.0)
    # P[g, i] = 1 if node i belongs to graph g
    pool = (batch[None, :] == jnp.arange(num_graphs)[:, None]).astype(jnp.float32)

    (w1r, w1n, b1, a1, w2r, w2n, b2, a2, wo, bo) = params
    hidden = w1r.shape[1]
    out_ch = wo.shape[1]
    assert out_ch == 1, "kernel tail assumes out_channels == 1 (module default)"

    # One packed VMEM parameter slab: [2*Fin + 2*H + 3, H]
    wpack = jnp.concatenate(
        [
            w1r, w1n,                     # conv1 stacked weights
            w2r, w2n,                     # conv2 stacked weights
            b1.reshape(1, hidden),
            b2.reshape(1, hidden),
            wo.T.reshape(1, hidden),      # lin_out weight row (O == 1)
        ],
        axis=0,
    ).astype(jnp.float32)
    # SMEM scalars: PReLU slopes + output bias
    scalars = jnp.stack([a1[0], a2[0], bo[0]]).astype(jnp.float32)

    vmem = pl.BlockSpec(memory_space=pltpu.MemorySpace.VMEM)
    smem = pl.BlockSpec(memory_space=pltpu.MemorySpace.SMEM)
    kernel = functools.partial(gnn_kernel, fin=fin, hidden=hidden)

    out = pl.pallas_call(
        kernel,
        out_shape=jax.ShapeDtypeStruct((num_graphs, out_ch), jnp.float32),
        in_specs=[vmem, vmem, vmem, vmem, smem],
        out_specs=vmem,
    )(x, adj, pool, wpack, scalars)
    return out


def reference_forward(x, edge_index, batch, params, num_graphs):
    """Pure-JAX reference mirroring the PyTorch module."""
    (w1r, w1n, b1, a1, w2r, w2n, b2, a2, wo, bo) = params
    N = x.shape[0]
    src, dst = edge_index[0], edge_index[1]
    adj = jnp.zeros((N, N), jnp.float32).at[dst, src].add(1.0)

    def prelu(h, a):
        return jnp.where(h >= 0, h, a * h)

    h = x @ w1r + (adj @ x) @ w1n + b1
    h = prelu(h, a1[0])
    h = h @ w2r + (adj @ h) @ w2n + b2
    h = prelu(h, a2[0])
    pool = (batch[None, :] == jnp.arange(num_graphs)[:, None]).astype(jnp.float32)
    pooled = pool @ h
    return pooled @ wo + bo


if __name__ == "__main__":
    key = jax.random.PRNGKey(0)
    N, F_IN, HIDDEN, OUT, E, G = 16, 8, 32, 1, 40, 2

    k = jax.random.split(key, 12)
    x = jax.random.normal(k[0], (N, F_IN), jnp.float32)
    edge_index = jax.random.randint(k[1], (2, E), 0, N, jnp.int32)
    batch = jnp.concatenate(
        [jnp.zeros(N // 2, jnp.int32), jnp.ones(N - N // 2, jnp.int32)]
    )

    # Deterministic parameter init (stored pre-transposed as [in, out]).
    scale = 0.1
    w1r = scale * jax.random.normal(k[2], (F_IN, HIDDEN), jnp.float32)
    w1n = scale * jax.random.normal(k[3], (F_IN, HIDDEN), jnp.float32)
    b1 = scale * jax.random.normal(k[4], (HIDDEN,), jnp.float32)
    a1 = jnp.array([0.25], jnp.float32)            # PReLU default init
    w2r = scale * jax.random.normal(k[5], (HIDDEN, HIDDEN), jnp.float32)
    w2n = scale * jax.random.normal(k[6], (HIDDEN, HIDDEN), jnp.float32)
    b2 = scale * jax.random.normal(k[7], (HIDDEN,), jnp.float32)
    a2 = jnp.array([0.25], jnp.float32)
    wo = scale * jax.random.normal(k[8], (HIDDEN, OUT), jnp.float32)
    bo = scale * jax.random.normal(k[9], (OUT,), jnp.float32)
    params = (w1r, w1n, b1, a1, w2r, w2n, b2, a2, wo, bo)

    out = gnn_forward(x, edge_index, batch, params, G)
    out = jax.block_until_ready(out)

    ref = reference_forward(x, edge_index, batch, params, G)
    assert out.shape == (G, OUT)
    assert jnp.allclose(out, ref, atol=1e-4, rtol=1e-4), (out, ref)
    print("KERNEL_OK")
</pallas_src>

<mosaic_0001>
module attributes {stable_mosaic.version = 11 : i64} {
  func.func @gnn_kernel(%arg0: memref<16x8xf32, #tpu.memory_space<vmem>>, %arg1: memref<16x16xf32, #tpu.memory_space<vmem>>, %arg2: memref<2x16xf32, #tpu.memory_space<vmem>>, %arg3: memref<83x32xf32, #tpu.memory_space<vmem>>, %arg4: memref<3xf32, #tpu.memory_space<smem>>, %arg5: memref<2x1xf32, #tpu.memory_space<vmem>>) attributes {dimension_semantics = [], scalar_prefetch = 0 : i64, scratch_operands = 0 : i64, tpu.core_type = #tpu.core_type<tc>} {
    %c0 = arith.constant 0 : index
    %c0_0 = arith.constant 0 : index
    %0 = vector.load %arg0[%c0, %c0_0] : memref<16x8xf32, #tpu.memory_space<vmem>>, vector<16x8xf32>
    %c0_1 = arith.constant 0 : index
    %c0_2 = arith.constant 0 : index
    %1 = vector.load %arg1[%c0_1, %c0_2] : memref<16x16xf32, #tpu.memory_space<vmem>>, vector<16x16xf32>
    %cst = arith.constant dense<0.000000e+00> : vector<16x8xf32>
    %2 = tpu.matmul %1, %0, %cst {dimension_numbers = #tpu.dot_dimension_numbers<[1], [0], [0], [1], [0, 0, 1, 1], [], []>} : vector<16x16xf32>, vector<16x8xf32>, vector<16x8xf32> -> vector<16x8xf32>
    %3 = tpu.concatenate %0, %2 in 1 : vector<16x8xf32>, vector<16x8xf32> -> vector<16x16xf32>
    %c0_3 = arith.constant 0 : index
    %c0_4 = arith.constant 0 : index
    %4 = vector.load %arg3[%c0_3, %c0_4] : memref<83x32xf32, #tpu.memory_space<vmem>>, vector<16x32xf32>
    %cst_5 = arith.constant dense<0.000000e+00> : vector<16x32xf32>
    %5 = tpu.matmul %3, %4, %cst_5 {dimension_numbers = #tpu.dot_dimension_numbers<[1], [0], [0], [1], [0, 0, 1, 1], [], []>} : vector<16x16xf32>, vector<16x32xf32>, vector<16x32xf32> -> vector<16x32xf32>
    %c80 = arith.constant 80 : index
    %c0_6 = arith.constant 0 : index
    %6 = vector.load %arg3[%c80, %c0_6] : memref<83x32xf32, #tpu.memory_space<vmem>>, vector<1x32xf32>
    %7 = vector.broadcast %6 : vector<1x32xf32> to vector<16x32xf32>
    %8 = arith.addf %5, %7 : vector<16x32xf32>
    %c0_7 = arith.constant 0 : index
    %9 = memref.load %arg4[%c0_7] : memref<3xf32, #tpu.memory_space<smem>>
    %cst_8 = arith.constant 0.000000e+00 : f32
    %10 = vector.broadcast %cst_8 : f32 to vector<16x32xf32>
    %11 = arith.cmpf oge, %8, %10 : vector<16x32xf32>
    %12 = vector.broadcast %9 : f32 to vector<16x32xf32>
    %13 = arith.mulf %12, %8 : vector<16x32xf32>
    %14 = arith.select %11, %8, %13 : vector<16x32xi1>, vector<16x32xf32>
    %cst_9 = arith.constant dense<0.000000e+00> : vector<16x32xf32>
    %15 = tpu.matmul %1, %14, %cst_9 {dimension_numbers = #tpu.dot_dimension_numbers<[1], [0], [0], [1], [0, 0, 1, 1], [], []>} : vector<16x16xf32>, vector<16x32xf32>, vector<16x32xf32> -> vector<16x32xf32>
    %16 = tpu.concatenate %14, %15 in 1 : vector<16x32xf32>, vector<16x32xf32> -> vector<16x64xf32>
    %c16 = arith.constant 16 : index
    %c0_10 = arith.constant 0 : index
    %17 = vector.load %arg3[%c16, %c0_10] : memref<83x32xf32, #tpu.memory_space<vmem>>, vector<64x32xf32>
    %cst_11 = arith.constant dense<0.000000e+00> : vector<16x32xf32>
    %18 = tpu.matmul %16, %17, %cst_11 {dimension_numbers = #tpu.dot_dimension_numbers<[1], [0], [0], [1], [0, 0, 1, 1], [], []>} : vector<16x64xf32>, vector<64x32xf32>, vector<16x32xf32> -> vector<16x32xf32>
    %c81 = arith.constant 81 : index
    %c0_12 = arith.constant 0 : index
    %19 = vector.load %arg3[%c81, %c0_12] : memref<83x32xf32, #tpu.memory_space<vmem>>, vector<1x32xf32>
    %20 = vector.broadcast %19 : vector<1x32xf32> to vector<16x32xf32>
    %21 = arith.addf %18, %20 : vector<16x32xf32>
    %c1 = arith.constant 1 : index
    %22 = memref.load %arg4[%c1] : memref<3xf32, #tpu.memory_space<smem>>
    %cst_13 = arith.constant 0.000000e+00 : f32
    %23 = vector.broadcast %cst_13 : f32 to vector<16x32xf32>
    %24 = arith.cmpf oge, %21, %23 : vector<16x32xf32>
    %25 = vector.broadcast %22 : f32 to vector<16x32xf32>
    %26 = arith.mulf %25, %21 : vector<16x32xf32>
    %27 = arith.select %24, %21, %26 : vector<16x32xi1>, vector<16x32xf32>
    %c0_14 = arith.constant 0 : index
    %c0_15 = arith.constant 0 : index
    %28 = vector.load %arg2[%c0_14, %c0_15] : memref<2x16xf32, #tpu.memory_space<vmem>>, vector<2x16xf32>
    %cst_16 = arith.constant dense<0.000000e+00> : vector<2x32xf32>
    %29 = tpu.matmul %28, %27, %cst_16 {dimension_numbers = #tpu.dot_dimension_numbers<[1], [0], [0], [1], [0, 0, 1, 1], [], []>} : vector<2x16xf32>, vector<16x32xf32>, vector<2x32xf32> -> vector<2x32xf32>
    %c82 = arith.constant 82 : index
    %c0_17 = arith.constant 0 : index
    %30 = vector.load %arg3[%c82, %c0_17] : memref<83x32xf32, #tpu.memory_space<vmem>>, vector<1x32xf32>
    %31 = vector.broadcast %30 : vector<1x32xf32> to vector<2x32xf32>
    %32 = arith.mulf %29, %31 : vector<2x32xf32>
    %cst_18 = arith.constant dense<0.000000e+00> : vector<2xf32>
    %33 = vector.multi_reduction <add>, %32, %cst_18 [1] : vector<2x32xf32> to vector<2xf32>
    %34 = vector.shape_cast %33 : vector<2xf32> to vector<2x1xf32>
    %c2 = arith.constant 2 : index
    %35 = memref.load %arg4[%c2] : memref<3xf32, #tpu.memory_space<smem>>
    %36 = vector.broadcast %35 : f32 to vector<2x1xf32>
    %37 = arith.addf %34, %36 : vector<2x1xf32>
    %c0_19 = arith.constant 0 : index
    %c0_20 = arith.constant 0 : index
    %38 = vector.load %arg5[%c0_19, %c0_20] : memref<2x1xf32, #tpu.memory_space<vmem>>, vector<2x1xf32>
    tpu.vector_store %arg5[%c0_19, %c0_20], %37 {strides = array<i32>} : memref<2x1xf32, #tpu.memory_space<vmem>>, vector<2x1xf32>,
    return
  }
}

</mosaic_0001>

<llo_original>
// kernel: tpu_custom_call.1
$region0: #{tpu_custom_call.1}
  #allocation0 [shape = 'u32[]', space=smem, size = 0x4, offset = 0x4, fixed_abs, tag = 'smem constant byte address 0x4 - core index']
  #allocation1 [shape = 'u32[144,128]{1,0:T(1,128)}', space=vmem, size = 0x12000, scoped, tag = 'internal scratch']
  %s0 = inlined_call_operand.vmem [shape: f32[16,8], index: 0, kind: input, shape index: {}]
  %s1 = inlined_call_operand.vmem [shape: f32[16,16], index: 1, kind: input, shape index: {}]
  %s2 = inlined_call_operand.vmem [shape: f32[2,16], index: 2, kind: input, shape index: {}]
  %s3 = inlined_call_operand.vmem [shape: f32[83,32], index: 3, kind: input, shape index: {}]
  %s4 = inlined_call_operand.vmem [shape: f32[3], index: 4, kind: input, shape index: {}]
  %s5 = inlined_call_operand.vmem [shape: f32[2,1], index: 5, kind: output, shape index: {}]
  %s6 = sld [smem:[#allocation0]]
  $region34: #{tpu_custom_call.1} parent=0
    _
  %s8 = ssub.s32 1, %s6
  %s9 = scalar_select 0, %s8, %s6
  $region1: #{tpu_custom_call.1} parent=0
    #allocation2 [shape = 'u8[512]{0}', space=smem, size = 0x200, scoped, tag = 'input window, operand 4, single buffered']
    #allocation3 [shape = 's32[1]{0}', space=sflag, size = 0x4, scoped, tag = 'scoped memory for tpu_custom_call.1']
    %10 = vsyncpa [#allocation3], 0
    // Predicated region
    $region2: #{tpu_custom_call.1} parent=1 // pred_check
      _
    $region3: #{tpu_custom_call.1} parent=1 // pred_check_branch
      %12 = sbr.rel (0) target = $region5
    $region4: #{tpu_custom_call.1} parent=1 // pred_region
      _
    $region5: #{tpu_custom_call.1} parent=1 // pred_fallthru
      _
    // Predicated region
    $region6: #{tpu_custom_call.1} parent=1 // pred_check
      _
    $region7: #{tpu_custom_call.1} parent=1 // pred_check_branch
      %14 = sbr.rel (0) target = $region9
    $region8: #{tpu_custom_call.1} parent=1 // pred_region
      _
    $region9: #{tpu_custom_call.1} parent=1 // pred_fallthru
      _
    // Predicated region
    $region10: #{tpu_custom_call.1} parent=1 // pred_check
      _
    $region11: #{tpu_custom_call.1} parent=1 // pred_check_branch
      %16 = sbr.rel (0) target = $region13
    $region12: #{tpu_custom_call.1} parent=1 // pred_region
      _
    $region13: #{tpu_custom_call.1} parent=1 // pred_fallthru
      _
    // Predicated region
    $region14: #{tpu_custom_call.1} parent=1 // pred_check
      _
    $region15: #{tpu_custom_call.1} parent=1 // pred_check_branch
      %18 = sbr.rel (0) target = $region17
    $region16: #{tpu_custom_call.1} parent=1 // pred_region
      _
    $region17: #{tpu_custom_call.1} parent=1 // pred_fallthru
      _
    // Predicated region
    $region18: #{tpu_custom_call.1} parent=1 // pred_check
      _
    $region19: #{tpu_custom_call.1} parent=1 // pred_check_branch
      %20 = sbr.rel (0) target = $region21
    $region20: #{tpu_custom_call.1} parent=1 // pred_region
      %s22 = ssub.s32 16, 16
      %23 = vsyncadd [#allocation3], %s22
      %s25 = sshll.u32 %s4, 4
      %s26 = int_to_ptr.vmem [resolvable:$true] %s25
      %28 = dma.vmem_to_smem %s26, 16, [#allocation2], [#allocation3]
    $region21: #{tpu_custom_call.1} parent=1 // pred_fallthru
      _
    // Predicated region
    $region22: #{tpu_custom_call.1} parent=1 // pred_check
      _
    $region23: #{tpu_custom_call.1} parent=1 // pred_check_branch
      %30 = sbr.rel (0) target = $region25
    $region24: #{tpu_custom_call.1} parent=1 // pred_region
      %31 = dma.done [#allocation3], 16
    $region25: #{tpu_custom_call.1} parent=1 // pred_fallthru
      _
    %32 = sfence
    %v33 = vld [vmem:[%s0] sm:$0xff]
    %v34 = vld [vmem:[%s0 + $0x8] sm:$0xff]
    %v35 = vld [vmem:[%s1] sm:$0xff]
    %v36 = vld [vmem:[%s1 + $0x8] sm:$0xff]
    %vm37 = vcmask 130048
    %v39 = vsel %vm37, %v35, 0
    %v42 = vsel %vm37, %v36, 0
    %44 = vmatprep.subr.mxu0 0.0
    %45 = vmatpush1.msra.mxu0 %v33
    %46 = vmatprep.subr.mxu0 0.0
    %47 = vmatpush1.msra.mxu0 %v34
    %48 = vmatprep.subr.mxu0 0.0
    %49 = vmatpush1.msra.mxu0 0.0
    %50 = vmatprep.subr.mxu0 0.0
    %51 = vmatpush1.msra.mxu0 0.0
    %52 = vmatprep.subr.mxu0 0.0
    %53 = vmatpush1.msra.mxu0 0.0
    %54 = vmatprep.subr.mxu0 0.0
    %55 = vmatpush1.msra.mxu0 0.0
    %56 = vmatprep.subr.mxu0 0.0
    %57 = vmatpush1.msra.mxu0 0.0
    %58 = vmatprep.subr.mxu0 0.0
    %59 = vmatpush1.msra.mxu0 0.0
    %60 = vmatprep.subr.mxu0 0.0
    %61 = vmatpush1.msra.mxu0 0.0
    %62 = vmatprep.subr.mxu0 0.0
    %63 = vmatpush1.msra.mxu0 0.0
    %64 = vmatprep.subr.mxu0 0.0
    %65 = vmatpush1.msra.mxu0 0.0
    %66 = vmatprep.subr.mxu0 0.0
    %67 = vmatpush1.msra.mxu0 0.0
    %68 = vmatprep.subr.mxu0 0.0
    %69 = vmatpush1.msra.mxu0 0.0
    %70 = vmatprep.subr.mxu0 0.0
    %71 = vmatpush1.msra.mxu0 0.0
    %72 = vmatprep.subr.mxu0 0.0
    %73 = vmatpush1.msra.mxu0 0.0
    %74 = vmatprep.subr.mxu0 0.0
    %75 = vmatpush1.msra.mxu0 0.0
    %76 = vmatprep.subr.mxu0 0.0
    %77 = vmatpush1.msra.mxu0 0.0
    %78 = vmatprep.subr.mxu0 0.0
    %79 = vmatpush1.msra.mxu0 0.0
    %80 = vmatprep.subr.mxu0 0.0
    %81 = vmatpush1.msra.mxu0 0.0
    %82 = vmatprep.subr.mxu0 0.0
    %83 = vmatpush1.msra.mxu0 0.0
    %84 = vmatprep.subr.mxu0 0.0
    %85 = vmatpush1.msra.mxu0 0.0
    %86 = vmatprep.subr.mxu0 0.0
    %87 = vmatpush1.msra.mxu0 0.0
    %88 = vmatprep.subr.mxu0 0.0
    %89 = vmatpush1.msra.mxu0 0.0
    %90 = vmatprep.subr.mxu0 0.0
    %91 = vmatpush1.msra.mxu0 0.0
    %92 = vmatprep.subr.mxu0 0.0
    %93 = vmatpush1.msra.mxu0 0.0
    %94 = vmatprep.subr.mxu0 0.0
    %95 = vmatpush1.msra.mxu0 0.0
    %96 = vmatprep.subr.mxu0 0.0
    %97 = vmatpush1.msra.mxu0 0.0
    %98 = vmatprep.subr.mxu0 0.0
    %99 = vmatpush1.msra.mxu0 0.0
    %100 = vmatprep.subr.mxu0 0.0
    %101 = vmatpush1.msra.mxu0 0.0
    %102 = vmatprep.subr.mxu0 0.0
    %103 = vmatpush1.msra.mxu0 0.0
    %104 = vmatprep.subr.mxu0 0.0
    %105 = vmatpush1.msra.mxu0 0.0
    %106 = vmatprep.subr.mxu0 0.0
    %107 = vmatpush1.msra.mxu0 0.0
    %108 = vmatprep.mubr.f32.mxu0 0.0
    %109 = vmatmul.mubr.f32.gmra.mrb[0].mxu0 %v39
    %v110 = vpop.f32.mrb[0].mxu0
    %v111 = vadd.f32 0.0, %v110
    %v112 = vpop.f32.mrb[0].mxu0
    %113 = vmatprep.mubr.f32.mxu0 0.0
    %114 = vmatmul.mubr.f32.gmra.mrb[0].mxu0 %v42
    %v115 = vpop.f32.mrb[0].mxu0
    %v116 = vadd.f32 0.0, %v115
    %v117 = vpop.f32.mrb[0].mxu0
    %118 = vdwg.mxu0
    %121 = vrot.lane.b32.xlu0 %v111, 8
    %v122 = vpop.permute.xlu0 %121
    %123 = vrot.lane.b32.xlu0 %v116, 8
    %v124 = vpop.permute.xlu0 %123
    %vm127 = vcmask 64512
    %v128 = vsel %vm127, %v33, %v122
    %v129 = vsel %vm127, %v34, %v124
    %v130 = vld [vmem:[%s3] sm:$0xff]
    %v131 = vld [vmem:[%s3 + $0x8] sm:$0xff]
    %v132 = vld [vmem:[%s3 + $0x50] sm:$0x1]
    %v133 = vlaneseq
    %v134 = vshrl.u32 %v133, 7
    %v135 = vsub.s32 0, %v134
    %v136 = vrot.slane %v132, %v135
    %v138 = vsel %vm37, %v128, 0
    %v141 = vsel %vm37, %v129, 0
    %143 = vmatprep.subr.mxu0 0.0
    %144 = vmatpush1.msra.mxu0 %v130
    %145 = vmatprep.subr.mxu0 0.0
    %146 = vmatpush1.msra.mxu0 %v131
    %147 = vmatprep.subr.mxu0 0.0
    %148 = vmatpush1.msra.mxu0 0.0
    %149 = vmatprep.subr.mxu0 0.0
    %150 = vmatpush1.msra.mxu0 0.0
    %151 = vmatprep.subr.mxu0 0.0
    %152 = vmatpush1.msra.mxu0 0.0
    %153 = vmatprep.subr.mxu0 0.0
    %154 = vmatpush1.msra.mxu0 0.0
    %155 = vmatprep.subr.mxu0 0.0
    %156 = vmatpush1.msra.mxu0 0.0
    %157 = vmatprep.subr.mxu0 0.0
    %158 = vmatpush1.msra.mxu0 0.0
    %159 = vmatprep.subr.mxu0 0.0
    %160 = vmatpush1.msra.mxu0 0.0
    %161 = vmatprep.subr.mxu0 0.0
    %162 = vmatpush1.msra.mxu0 0.0
    %163 = vmatprep.subr.mxu0 0.0
    %164 = vmatpush1.msra.mxu0 0.0
    %165 = vmatprep.subr.mxu0 0.0
    %166 = vmatpush1.msra.mxu0 0.0
    %167 = vmatprep.subr.mxu0 0.0
    %168 = vmatpush1.msra.mxu0 0.0
    %169 = vmatprep.subr.mxu0 0.0
    %170 = vmatpush1.msra.mxu0 0.0
    %171 = vmatprep.subr.mxu0 0.0
    %172 = vmatpush1.msra.mxu0 0.0
    %173 = vmatprep.subr.mxu0 0.0
    %174 = vmatpush1.msra.mxu0 0.0
    %175 = vmatprep.subr.mxu0 0.0
    %176 = vmatpush1.msra.mxu0 0.0
    %177 = vmatprep.subr.mxu0 0.0
    %178 = vmatpush1.msra.mxu0 0.0
    %179 = vmatprep.subr.mxu0 0.0
    %180 = vmatpush1.msra.mxu0 0.0
    %181 = vmatprep.subr.mxu0 0.0
    %182 = vmatpush1.msra.mxu0 0.0
    %183 = vmatprep.subr.mxu0 0.0
    %184 = vmatpush1.msra.mxu0 0.0
    %185 = vmatprep.subr.mxu0 0.0
    %186 = vmatpush1.msra.mxu0 0.0
    %187 = vmatprep.subr.mxu0 0.0
    %188 = vmatpush1.msra.mxu0 0.0
    %189 = vmatprep.subr.mxu0 0.0
    %190 = vmatpush1.msra.mxu0 0.0
    %191 = vmatprep.subr.mxu0 0.0
    %192 = vmatpush1.msra.mxu0 0.0
    %193 = vmatprep.subr.mxu0 0.0
    %194 = vmatpush1.msra.mxu0 0.0
    %195 = vmatprep.subr.mxu0 0.0
    %196 = vmatpush1.msra.mxu0 0.0
    %197 = vmatprep.subr.mxu0 0.0
    %198 = vmatpush1.msra.mxu0 0.0
    %199 = vmatprep.subr.mxu0 0.0
    %200 = vmatpush1.msra.mxu0 0.0
    %201 = vmatprep.subr.mxu0 0.0
    %202 = vmatpush1.msra.mxu0 0.0
    %203 = vmatprep.subr.mxu0 0.0
    %204 = vmatpush1.msra.mxu0 0.0
    %205 = vmatprep.subr.mxu0 0.0
    %206 = vmatpush1.msra.mxu0 0.0
    %207 = vmatprep.mubr.f32.mxu0 0.0
    %208 = vmatmul.mubr.f32.gmra.mrb[0].mxu0 %v138
    %v209 = vpop.f32.mrb[0].mxu0
    %v210 = vadd.f32 %v136, %v209
    %v211 = vpop.f32.mrb[0].mxu0
    %212 = vmatprep.mubr.f32.mxu0 0.0
    %213 = vmatmul.mubr.f32.gmra.mrb[0].mxu0 %v141
    %v214 = vpop.f32.mrb[0].mxu0
    %v215 = vadd.f32 %v136, %v214
    %v216 = vpop.f32.mrb[0].mxu0
    %217 = vdwg.mxu0
    %s218 = sld [smem:[#allocation2]]
    %vm219 = vcmp.ge.f32.partialorder %v210, 0.0
    %vm220 = vcmp.ge.f32.partialorder %v215, 0.0
    %v221 = vstv %s218
    %v222 = vmul.f32 %v221, %v210
    %v223 = vmul.f32 %v221, %v215
    %v224 = vsel %vm219, %v210, %v222
    %v225 = vsel %vm220, %v215, %v223
    %226 = vmatprep.subr.mxu0 0.0
    %227 = vmatpush1.msra.mxu0 %v224
    %228 = vmatprep.subr.mxu0 0.0
    %229 = vmatpush1.msra.mxu0 %v225
    %230 = vmatprep.subr.mxu0 0.0
    %231 = vmatpush1.msra.mxu0 0.0
    %232 = vmatprep.subr.mxu0 0.0
    %233 = vmatpush1.msra.mxu0 0.0
    %234 = vmatprep.subr.mxu0 0.0
    %235 = vmatpush1.msra.mxu0 0.0
    %236 = vmatprep.subr.mxu0 0.0
    %237 = vmatpush1.msra.mxu0 0.0
    %238 = vmatprep.subr.mxu0 0.0
    %239 = vmatpush1.msra.mxu0 0.0
    %240 = vmatprep.subr.mxu0 0.0
    %241 = vmatpush1.msra.mxu0 0.0
    %242 = vmatprep.subr.mxu0 0.0
    %243 = vmatpush1.msra.mxu0 0.0
    %244 = vmatprep.subr.mxu0 0.0
    %245 = vmatpush1.msra.mxu0 0.0
    %246 = vmatprep.subr.mxu0 0.0
    %247 = vmatpush1.msra.mxu0 0.0
    %248 = vmatprep.subr.mxu0 0.0
    %249 = vmatpush1.msra.mxu0 0.0
    %250 = vmatprep.subr.mxu0 0.0
    %251 = vmatpush1.msra.mxu0 0.0
    %252 = vmatprep.subr.mxu0 0.0
    %253 = vmatpush1.msra.mxu0 0.0
    %254 = vmatprep.subr.mxu0 0.0
    %255 = vmatpush1.msra.mxu0 0.0
    %256 = vmatprep.subr.mxu0 0.0
    %257 = vmatpush1.msra.mxu0 0.0
    %258 = vmatprep.subr.mxu0 0.0
    %259 = vmatpush1.msra.mxu0 0.0
    %260 = vmatprep.subr.mxu0 0.0
    %261 = vmatpush1.msra.mxu0 0.0
    %262 = vmatprep.subr.mxu0 0.0
    %263 = vmatpush1.msra.mxu0 0.0
    %264 = vmatprep.subr.mxu0 0.0
    %265 = vmatpush1.msra.mxu0 0.0
    %266 = vmatprep.subr.mxu0 0.0
    %267 = vmatpush1.msra.mxu0 0.0
    %268 = vmatprep.subr.mxu0 0.0
    %269 = vmatpush1.msra.mxu0 0.0
    %270 = vmatprep.subr.mxu0 0.0
    %271 = vmatpush1.msra.mxu0 0.0
    %272 = vmatprep.subr.mxu0 0.0
    %273 = vmatpush1.msra.mxu0 0.0
    %274 = vmatprep.subr.mxu0 0.0
    %275 = vmatpush1.msra.mxu0 0.0
    %276 = vmatprep.subr.mxu0 0.0
    %277 = vmatpush1.msra.mxu0 0.0
    %278 = vmatprep.subr.mxu0 0.0
    %279 = vmatpush1.msra.mxu0 0.0
    %280 = vmatprep.subr.mxu0 0.0
    %281 = vmatpush1.msra.mxu0 0.0
    %282 = vmatprep.subr.mxu0 0.0
    %283 = vmatpush1.msra.mxu0 0.0
    %284 = vmatprep.subr.mxu0 0.0
    %285 = vmatpush1.msra.mxu0 0.0
    %286 = vmatprep.subr.mxu0 0.0
    %287 = vmatpush1.msra.mxu0 0.0
    %288 = vmatprep.subr.mxu0 0.0
    %289 = vmatpush1.msra.mxu0 0.0
    %290 = vmatprep.mubr.f32.mxu0 0.0
    %291 = vmatmul.mubr.f32.gmra.mrb[0].mxu0 %v39
    %v292 = vpop.f32.mrb[0].mxu0
    %v293 = vadd.f32 0.0, %v292
    %v294 = vpop.f32.mrb[0].mxu0
    %295 = vmatprep.mubr.f32.mxu0 0.0
    %296 = vmatmul.mubr.f32.gmra.mrb[0].mxu0 %v42
    %v297 = vpop.f32.mrb[0].mxu0
    %v298 = vadd.f32 0.0, %v297
    %v299 = vpop.f32.mrb[0].mxu0
    %300 = vdwg.mxu0
    %303 = vrot.lane.b32.xlu0 %v293, 32
    %v304 = vpop.permute.xlu0 %303
    %305 = vrot.lane.b32.xlu0 %v298, 32
    %v306 = vpop.permute.xlu0 %305
    %vm309 = vcmask 261120
    %v310 = vsel %vm309, %v224, %v304
    %v311 = vsel %vm309, %v225, %v306
    %v312 = vld [vmem:[%s3 + $0x10] sm:$0xff]
    %v313 = vld [vmem:[%s3 + $0x18] sm:$0xff]
    %v314 = vld [vmem:[%s3 + $0x20] sm:$0xff]
    %v315 = vld [vmem:[%s3 + $0x28] sm:$0xff]
    %v316 = vld [vmem:[%s3 + $0x30] sm:$0xff]
    %v317 = vld [vmem:[%s3 + $0x38] sm:$0xff]
    %v318 = vld [vmem:[%s3 + $0x40] sm:$0xff]
    %v319 = vld [vmem:[%s3 + $0x48] sm:$0xff]
    %v320 = vld [vmem:[%s3 + $0x51] sm:$0x1]
    %v321 = vlaneseq
    %v322 = vshrl.u32 %v321, 7
    %v323 = vsub.s32 0, %v322
    %v324 = vrot.slane %v320, %v323
    %vm325 = vcmask 523264
    %v327 = vsel %vm325, %v310, 0
    %v330 = vsel %vm325, %v311, 0
    %332 = vmatprep.subr.mxu0 0.0
    %333 = vmatpush1.msra.mxu0 %v312
    %334 = vmatprep.subr.mxu0 0.0
    %335 = vmatpush1.msra.mxu0 %v313
    %336 = vmatprep.subr.mxu0 0.0
    %337 = vmatpush1.msra.mxu0 %v314
    %338 = vmatprep.subr.mxu0 0.0
    %339 = vmatpush1.msra.mxu0 %v315
    %340 = vmatprep.subr.mxu0 0.0
    %341 = vmatpush1.msra.mxu0 %v316
    %342 = vmatprep.subr.mxu0 0.0
    %343 = vmatpush1.msra.mxu0 %v317
    %344 = vmatprep.subr.mxu0 0.0
    %345 = vmatpush1.msra.mxu0 %v318
    %346 = vmatprep.subr.mxu0 0.0
    %347 = vmatpush1.msra.mxu0 %v319
    %348 = vmatprep.subr.mxu0 0.0
    %349 = vmatpush1.msra.mxu0 0.0
    %350 = vmatprep.subr.mxu0 0.0
    %351 = vmatpush1.msra.mxu0 0.0
    %352 = vmatprep.subr.mxu0 0.0
    %353 = vmatpush1.msra.mxu0 0.0
    %354 = vmatprep.subr.mxu0 0.0
    %355 = vmatpush1.msra.mxu0 0.0
    %356 = vmatprep.subr.mxu0 0.0
    %357 = vmatpush1.msra.mxu0 0.0
    %358 = vmatprep.subr.mxu0 0.0
    %359 = vmatpush1.msra.mxu0 0.0
    %360 = vmatprep.subr.mxu0 0.0
    %361 = vmatpush1.msra.mxu0 0.0
    %362 = vmatprep.subr.mxu0 0.0
    %363 = vmatpush1.msra.mxu0 0.0
    %364 = vmatprep.subr.mxu0 0.0
    %365 = vmatpush1.msra.mxu0 0.0
    %366 = vmatprep.subr.mxu0 0.0
    %367 = vmatpush1.msra.mxu0 0.0
    %368 = vmatprep.subr.mxu0 0.0
    %369 = vmatpush1.msra.mxu0 0.0
    %370 = vmatprep.subr.mxu0 0.0
    %371 = vmatpush1.msra.mxu0 0.0
    %372 = vmatprep.subr.mxu0 0.0
    %373 = vmatpush1.msra.mxu0 0.0
    %374 = vmatprep.subr.mxu0 0.0
    %375 = vmatpush1.msra.mxu0 0.0
    %376 = vmatprep.subr.mxu0 0.0
    %377 = vmatpush1.msra.mxu0 0.0
    %378 = vmatprep.subr.mxu0 0.0
    %379 = vmatpush1.msra.mxu0 0.0
    %380 = vmatprep.subr.mxu0 0.0
    %381 = vmatpush1.msra.mxu0 0.0
    %382 = vmatprep.subr.mxu0 0.0
    %383 = vmatpush1.msra.mxu0 0.0
    %384 = vmatprep.subr.mxu0 0.0
    %385 = vmatpush1.msra.mxu0 0.0
    %386 = vmatprep.subr.mxu0 0.0
    %387 = vmatpush1.msra.mxu0 0.0
    %388 = vmatprep.subr.mxu0 0.0
    %389 = vmatpush1.msra.mxu0 0.0
    %390 = vmatprep.subr.mxu0 0.0
    %391 = vmatpush1.msra.mxu0 0.0
    %392 = vmatprep.subr.mxu0 0.0
    %393 = vmatpush1.msra.mxu0 0.0
    %394 = vmatprep.subr.mxu0 0.0
    %395 = vmatpush1.msra.mxu0 0.0
    %396 = vmatprep.mubr.f32.mxu0 0.0
    %397 = vmatmul.mubr.f32.gmra.mrb[0].mxu0 %v327
    %v398 = vpop.f32.mrb[0].mxu0
    %v399 = vadd.f32 %v324, %v398
    %v400 = vpop.f32.mrb[0].mxu0
    %401 = vmatprep.mubr.f32.mxu0 0.0
    %402 = vmatmul.mubr.f32.gmra.mrb[0].mxu0 %v330
    %v403 = vpop.f32.mrb[0].mxu0
    %v404 = vadd.f32 %v324, %v403
    %v405 = vpop.f32.mrb[0].mxu0
    %406 = vdwg.mxu0
    %s407 = sld [smem:[#allocation2 + $0x1]]
    %vm408 = vcmp.ge.f32.partialorder %v399, 0.0
    %vm409 = vcmp.ge.f32.partialorder %v404, 0.0
    %v410 = vstv %s407
    %v411 = vmul.f32 %v410, %v399
    %v412 = vmul.f32 %v410, %v404
    %v413 = vsel %vm408, %v399, %v411
    %v414 = vsel %vm409, %v404, %v412
    %v415 = vld [vmem:[%s2] sm:$0x3]
    %v417 = vsel %vm37, %v415, 0
    %419 = vmatprep.subr.mxu0 0.0
    %420 = vmatpush1.msra.mxu0 %v413
    %421 = vmatprep.subr.mxu0 0.0
    %422 = vmatpush1.msra.mxu0 %v414
    %423 = vmatprep.subr.mxu0 0.0
    %424 = vmatpush1.msra.mxu0 0.0
    %425 = vmatprep.subr.mxu0 0.0
    %426 = vmatpush1.msra.mxu0 0.0
    %427 = vmatprep.subr.mxu0 0.0
    %428 = vmatpush1.msra.mxu0 0.0
    %429 = vmatprep.subr.mxu0 0.0
    %430 = vmatpush1.msra.mxu0 0.0
    %431 = vmatprep.subr.mxu0 0.0
    %432 = vmatpush1.msra.mxu0 0.0
    %433 = vmatprep.subr.mxu0 0.0
    %434 = vmatpush1.msra.mxu0 0.0
    %435 = vmatprep.subr.mxu0 0.0
    %436 = vmatpush1.msra.mxu0 0.0
    %437 = vmatprep.subr.mxu0 0.0
    %438 = vmatpush1.msra.mxu0 0.0
    %439 = vmatprep.subr.mxu0 0.0
    %440 = vmatpush1.msra.mxu0 0.0
    %441 = vmatprep.subr.mxu0 0.0
    %442 = vmatpush1.msra.mxu0 0.0
    %443 = vmatprep.subr.mxu0 0.0
    %444 = vmatpush1.msra.mxu0 0.0
    %445 = vmatprep.subr.mxu0 0.0
    %446 = vmatpush1.msra.mxu0 0.0
    %447 = vmatprep.subr.mxu0 0.0
    %448 = vmatpush1.msra.mxu0 0.0
    %449 = vmatprep.subr.mxu0 0.0
    %450 = vmatpush1.msra.mxu0 0.0
    %451 = vmatprep.subr.mxu0 0.0
    %452 = vmatpush1.msra.mxu0 0.0
    %453 = vmatprep.subr.mxu0 0.0
    %454 = vmatpush1.msra.mxu0 0.0
    %455 = vmatprep.subr.mxu0 0.0
    %456 = vmatpush1.msra.mxu0 0.0
    %457 = vmatprep.subr.mxu0 0.0
    %458 = vmatpush1.msra.mxu0 0.0
    %459 = vmatprep.subr.mxu0 0.0
    %460 = vmatpush1.msra.mxu0 0.0
    %461 = vmatprep.subr.mxu0 0.0
    %462 = vmatpush1.msra.mxu0 0.0
    %463 = vmatprep.subr.mxu0 0.0
    %464 = vmatpush1.msra.mxu0 0.0
    %465 = vmatprep.subr.mxu0 0.0
    %466 = vmatpush1.msra.mxu0 0.0
    %467 = vmatprep.subr.mxu0 0.0
    %468 = vmatpush1.msra.mxu0 0.0
    %469 = vmatprep.subr.mxu0 0.0
    %470 = vmatpush1.msra.mxu0 0.0
    %471 = vmatprep.subr.mxu0 0.0
    %472 = vmatpush1.msra.mxu0 0.0
    %473 = vmatprep.subr.mxu0 0.0
    %474 = vmatpush1.msra.mxu0 0.0
    %475 = vmatprep.subr.mxu0 0.0
    %476 = vmatpush1.msra.mxu0 0.0
    %477 = vmatprep.subr.mxu0 0.0
    %478 = vmatpush1.msra.mxu0 0.0
    %479 = vmatprep.subr.mxu0 0.0
    %480 = vmatpush1.msra.mxu0 0.0
    %481 = vmatprep.subr.mxu0 0.0
    %482 = vmatpush1.msra.mxu0 0.0
    %483 = vmatprep.mubr.f32.mxu0 0.0
    %484 = vmatmul.mubr.f32.gmra.mrb[0].mxu0 %v417
    %v485 = vpop.f32.mrb[0].mxu0
    %v486 = vadd.f32 0.0, %v485
    %v487 = vpop.f32.mrb[0].mxu0
    %488 = vdwg.mxu0
    %v489 = vld [vmem:[%s3 + $0x52] sm:$0x1]
    %v490 = vlaneseq
    %v491 = vshrl.u32 %v490, 7
    %v492 = vsub.s32 0, %v491
    %v493 = vrot.slane %v489, %v492
    %v494 = vmul.f32 %v486, %v493
    %vm495 = vcmask 254976
    %v496 = vsel %vm495, %v494, 0.0
    %497 = vadd.xlane.f32.xlu0 %v496
    %v498 = vpop.xlane.xlu0 %497
    %s499 = sld [smem:[#allocation2 + $0x2]]
    %v500 = vstv %s499
    %v501 = vadd.f32 %v498, %v500
    %vm502 = vcmask 1024
    %503 = vst.msk [vmem:[%s5] sm:$0x3] %vm502, %v501
    // Predicated region
    $region26: #{tpu_custom_call.1} parent=1 // pred_check
      _
    $region27: #{tpu_custom_call.1} parent=1 // pred_check_branch
      %505 = sbr.rel (0) target = $region29
    $region28: #{tpu_custom_call.1} parent=1 // pred_region
      _
    $region29: #{tpu_custom_call.1} parent=1 // pred_fallthru
      _
    // Predicated region
    $region30: #{tpu_custom_call.1} parent=1 // pred_check
      _
    $region31: #{tpu_custom_call.1} parent=1 // pred_check_branch
      %507 = sbr.rel (0) target = $region33
    $region32: #{tpu_custom_call.1} parent=1 // pred_region
      _
    $region33: #{tpu_custom_call.1} parent=1 // pred_fallthru
      _
    %508 = vsyncpa [#allocation3], 1

</llo_original>
